<compile_context>
chip_gen: v7x
topology: tpu7x:2x2x1
jax: 0.10.0
libtpu: 0.0.40
codegen_flags: <defaults>
</compile_context>

<pallas_src>
import math

import jax
import jax.numpy as jnp
from jax.experimental import pallas as pl
from jax.experimental.pallas import tpu as pltpu

_LANE = 128
_SUBLANE = 8
# ~4 MiB per block: (2 input bufs + 2 output bufs) * block stays well under the
# 16 MiB (v5e) / 32 MiB (v6e, v7x) scoped-VMEM defaults on every generation.
_MAX_BLOCK_BYTES = 4 * 1024 * 1024


def _identity(v):
    return v


def _elementwise_kernel(func):
    """Kernel factory: fuse the wrapped Lambda func into the kernel body."""

    def kernel(x_ref, o_ref):
        o_ref[...] = func(x_ref[...])

    return kernel


def _lane_dense_2d(total):
    """Pick (rows, cols) with cols a multiple of 128 and rows a multiple of 8."""
    for cols in (2048, 1024, 512, 256, _LANE):
        if total % cols == 0:
            rows = total // cols
            if rows % _SUBLANE == 0:
                return rows, cols
    return None


def pallas_elementwise(x, func=_identity):
    """Apply `func` elementwise over x in a tiled, lane-dense Pallas kernel.

    Result has x's shape (dtype follows func).  For the identity func the
    output HBM buffer is aliased onto the input so the pass-through does not
    pay a second HBM stream.
    """
    total = int(math.prod(x.shape))
    shape2d = _lane_dense_2d(total)

    if shape2d is None:
        # Ragged total: fall back to a single full-array block (correct; only
        # expected for tiny/odd demo shapes).
        rows, cols = 1, total
        block_rows = 1
    else:
        rows, cols = shape2d
        # Largest multiple-of-8 row count that divides `rows` and keeps one
        # block under the VMEM budget (same sizing works on v5e/v6e/v7x).
        max_rows_by_bytes = max(
            _SUBLANE,
            (_MAX_BLOCK_BYTES // (cols * x.dtype.itemsize)) // _SUBLANE * _SUBLANE,
        )
        block_rows = min(rows, max_rows_by_bytes)
        while rows % block_rows != 0:
            block_rows -= _SUBLANE

    x2d = x.reshape(rows, cols)  # metadata-only on contiguous input

    out_dtype = jax.eval_shape(
        func, jax.ShapeDtypeStruct((block_rows, cols), x.dtype)
    ).dtype

    kwargs = {}
    if func is _identity and out_dtype == x.dtype:
        # Identity pass-through: alias output onto the input HBM buffer.
        kwargs["input_output_aliases"] = {0: 0}

    out2d = pl.pallas_call(
        _elementwise_kernel(func),
        out_shape=jax.ShapeDtypeStruct((rows, cols), out_dtype),
        grid=(rows // block_rows,),
        in_specs=[pl.BlockSpec((block_rows, cols), lambda i: (i, 0))],
        out_specs=pl.BlockSpec((block_rows, cols), lambda i: (i, 0)),
        compiler_params=pltpu.CompilerParams(dimension_semantics=("parallel",)),
        **kwargs,
    )(x2d)

    return out2d.reshape(x.shape)


class Lambda:
    """Pallas port of the torch `Lambda` wrapper: forward(x) = func(x)."""

    def __init__(self, func):
        self.func = func

    def __call__(self, x):
        return self.func(x)


def lambda_flatten(x):
    """torch: x.view(x.size(0), -1).

    The view is metadata-only (free reshape).  The data pass is a tiled,
    lane-dense, input/output-aliased Pallas identity kernel — the same kernel
    fuses any elementwise Lambda func via `pallas_elementwise(x, func=...)`.
    """
    n = x.shape[0]
    y = pallas_elementwise(x)          # tiled lane-dense pass (identity, aliased)
    return y.reshape(n, -1)            # metadata-only view, matches torch .view
    # TODO(synk): Lambda funcs that are neither shape-only nor elementwise
    # (e.g. reductions) are not fused into this kernel.


if __name__ == "__main__":
    key = jax.random.PRNGKey(0)
    x = jax.random.normal(key, (2, 4, 16, 16), dtype=jnp.float32)  # NCHW

    # torch equivalent: Lambda(lambda x: x.view(x.size(0), -1))
    model = Lambda(lambda_flatten)
    out = jax.block_until_ready(jax.jit(model)(x))

    ref = x.reshape(x.shape[0], -1)
    assert out.shape == (2, 4 * 16 * 16), out.shape
    assert out.dtype == x.dtype, out.dtype
    assert jnp.array_equal(out, ref)

    # Generic Lambda wrapping a non-trivial elementwise func, fused into the
    # same Pallas kernel body (single mem-bound pass).
    relu_model = Lambda(lambda v: pallas_elementwise(v, func=lambda t: jnp.maximum(t, 0.0)))
    out2 = jax.block_until_ready(jax.jit(relu_model)(x))
    assert jnp.array_equal(out2, jnp.maximum(x, 0.0))

    print("KERNEL_OK")
</pallas_src>

<mosaic_0001>
module attributes {stable_mosaic.version = 11 : i64} {
  func.func @kernel(%arg0: i32, %arg1: memref<8x256xf32, #tpu.memory_space<vmem>>, %arg2: memref<8x256xf32, #tpu.memory_space<vmem>>) attributes {dimension_semantics = [#tpu.dimension_semantics<parallel>], iteration_bounds = array<i64: 1>, scalar_prefetch = 0 : i64, scratch_operands = 0 : i64, tpu.core_type = #tpu.core_type<tc>, window_params = [{transform_indices = @transform_0, window_bounds = array<i64: 8, 256>}, {transform_indices = @transform_1, window_bounds = array<i64: 8, 256>}]} {
    %c0 = arith.constant 0 : index
    %c0_0 = arith.constant 0 : index
    %0 = vector.load %arg1[%c0, %c0_0] : memref<8x256xf32, #tpu.memory_space<vmem>>, vector<8x256xf32>
    %c0_1 = arith.constant 0 : index
    %c0_2 = arith.constant 0 : index
    %1 = vector.load %arg2[%c0_1, %c0_2] : memref<8x256xf32, #tpu.memory_space<vmem>>, vector<8x256xf32>
    tpu.vector_store %arg2[%c0_1, %c0_2], %0 {strides = array<i32>} : memref<8x256xf32, #tpu.memory_space<vmem>>, vector<8x256xf32>,
    return
  }
  func.func @transform_0(%arg0: i32) -> (i32, i32) {
    %c0_i32 = arith.constant 0 : i32
    %c0_i32_0 = arith.constant 0 : i32
    return %arg0, %c0_i32 : i32, i32
  }
  func.func @transform_1(%arg0: i32) -> (i32, i32) {
    %c0_i32 = arith.constant 0 : i32
    %c0_i32_0 = arith.constant 0 : i32
    return %arg0, %c0_i32 : i32, i32
  }
}

</mosaic_0001>

<llo_original>
// kernel: _unnamed_function_.1
$region0: #{_unnamed_function_.1}
  #allocation0 [shape = 'u32[]', space=smem, size = 0x4, offset = 0x4, fixed_abs, tag = 'smem constant byte address 0x4 - core index']
  #allocation1 [shape = 'u32[144,128]{1,0:T(1,128)}', space=vmem, size = 0x12000, scoped, tag = 'internal scratch']
  %s0 = inlined_call_operand.vmem [shape: f32[8,256], index: 0, kind: input, shape index: {}, may-alias: {0,1}]
  %s1 = inlined_call_operand.vmem [shape: f32[8,256], index: 1, kind: output, shape index: {}, may-alias: {0,1}]
  %s2 = sld [smem:[#allocation0]]
  $region14: #{_unnamed_function_.1} parent=0
    _
  %s4 = ssub.s32 1, %s2
  %s5 = scalar_select 0, %s4, %s2
  // Predicated region
  $region2: #{_unnamed_function_.1} parent=0 // pred_check
    _
  $region3: #{_unnamed_function_.1} parent=0 // pred_check_branch
    %7 = sbr.rel (0) target = $region5
  $region4: #{_unnamed_function_.1} parent=0 // pred_region
    _
  $region5: #{_unnamed_function_.1} parent=0 // pred_fallthru
    _
  %v8 = vld [vmem:[%s0] sm:$0xff]
  %v9 = vld [vmem:[%s0 + $0x8] sm:$0xff]
  %10 = vst [vmem:[%s1] sm:$0xff] %v8
  %11 = vst [vmem:[%s1 + $0x8] sm:$0xff] %v9
  // Predicated region
  $region6: #{_unnamed_function_.1} parent=0 // pred_check
    _
  $region7: #{_unnamed_function_.1} parent=0 // pred_check_branch
    %13 = sbr.rel (0) target = $region9
  $region8: #{_unnamed_function_.1} parent=0 // pred_region
    _
  $region9: #{_unnamed_function_.1} parent=0 // pred_fallthru
    _
  // Predicated region
  $region10: #{_unnamed_function_.1} parent=0 // pred_check
    _
  $region11: #{_unnamed_function_.1} parent=0 // pred_check_branch
    %15 = sbr.rel (0) target = $region13
  $region12: #{_unnamed_function_.1} parent=0 // pred_region
    _
  $region13: #{_unnamed_function_.1} parent=0 // pred_fallthru
    _

</llo_original>
